<compile_context>
chip_gen: v7x
topology: tpu7x:2x2x1
jax: 0.10.0
libtpu: 0.0.40
codegen_flags: <defaults>
</compile_context>

<pallas_src>
import functools

import jax
import jax.numpy as jnp
from jax.experimental import pallas as pl
from jax.experimental.pallas import tpu as pltpu


def _round_up(x, m):
    return (x + m - 1) // m * m


def _cdiv(a, b):
    return (a + b - 1) // b


def _lora_kernel(x_ref, a_ref, b_ref, o_ref, xa_ref, *, scale):
    # First matmul (x @ A) once per row tile; reused across all out-dim tiles.
    # The j (out-dim) grid axis MUST stay "arbitrary" because of this reuse.
    @pl.when(pl.program_id(1) == 0)
    def _():
        xa_ref[...] = jnp.dot(
            x_ref[...], a_ref[...],
            preferred_element_type=jnp.float32).astype(xa_ref.dtype)

    # Second matmul on the MXU with f32 accumulation; the static alpha/rank
    # scale is a compile-time constant applied here (VPU mul, hidden under the
    # MXU / DMA bottleneck), then a lane-dense store.
    acc = jnp.dot(xa_ref[...], b_ref[...], preferred_element_type=jnp.float32)
    o_ref[...] = (acc * scale).astype(o_ref.dtype)


def lora_forward(x, A, B, alpha, rank, *, tm=None, tn=None, io_dtype=None):
    """out = alpha/rank * (x @ A @ B), x: (..., in_dim) -> (..., out_dim)."""
    in_dim, r = A.shape
    r2, out_dim = B.shape
    assert r == r2 and x.shape[-1] == in_dim

    lead = x.shape[:-1]
    M = 1
    for d in lead:
        M *= int(d)

    compute_dtype = jnp.dtype(io_dtype) if io_dtype is not None else jnp.dtype(x.dtype)
    out_dtype = compute_dtype
    scale = float(alpha) / float(rank)

    # Flat 2-D views (reshape of contiguous x is free; astype is a no-op when
    # the dtype already matches).
    x2 = x.reshape(M, in_dim).astype(compute_dtype)
    Ac = A.astype(compute_dtype)
    Bc = B.astype(compute_dtype)

    # ---- per-generation VMEM budget -----------------------------------------
    try:
        vmem_cap = int(getattr(pltpu.get_tpu_info(), "vmem_capacity_bytes",
                               64 << 20))
    except Exception:
        vmem_cap = 64 << 20                      # conservative fallback
    budget = (vmem_cap * 3) // 4                 # ~48 MiB v7x, ~96 MiB v5e/v6e
    limit_cap = max(vmem_cap - (8 << 20), 32 << 20)  # never the full physical VMEM

    # ---- tile sizing ---------------------------------------------------------
    if tm is None:
        tm = 512 if budget >= (96 << 20) else 256
    if tn is None:
        tn = 4096 if budget >= (96 << 20) else 2048

    # Row tile: multiple of 16 (valid for f32 and bf16 sublane packing).
    tm = max(16, _round_up(min(tm, _round_up(M, 16)), 16))

    # Output column tile: never pad beyond what out_dim needs.
    tn = max(128, _round_up(tn, 128))
    out_aligned = _round_up(out_dim, 128)
    if out_aligned <= tn:
        tn = out_dim                  # single full-dim column tile (always legal)
    else:
        tn = min(tn, out_aligned)     # 128-multiple; ragged last tile is clipped

    cb = jnp.dtype(compute_dtype).itemsize
    ob = jnp.dtype(out_dtype).itemsize

    def _working_set(tm_, tn_):
        lane = lambda n: _round_up(n, 128)
        sub = lambda n: _round_up(n, 8)
        return (2 * tm_ * lane(in_dim) * cb        # x tile, double-buffered
                + 2 * tm_ * lane(tn_) * ob         # out tile, double-buffered
                + sub(in_dim) * lane(r) * cb       # A, resident
                + 2 * sub(r) * lane(tn_) * cb      # B column tile, double-buffered
                + tm_ * lane(r) * cb)              # xa scratch

    while tm > 16 and _working_set(tm, tn) > budget:
        tm = max(16, _round_up(tm // 2, 16))
    while tn > 128 and _working_set(tm, tn) > budget:
        tn = max(128, _round_up(tn // 2, 128))

    # Guarantee >= 2 row tiles when possible so both v7x TensorCores get work
    # (negligible cost on single-TC v5e/v6e: one extra grid step).
    if _cdiv(M, tm) < 2 and M > 32:
        tm = max(16, _round_up(_cdiv(M, 2), 16))

    grid_m = _cdiv(M, tm)
    grid_n = _cdiv(out_dim, tn)
    grid = (grid_m, grid_n)

    flops = 2 * M * r * (in_dim + out_dim)
    bytes_accessed = (M * in_dim * cb            # x read
                      + in_dim * r * cb          # A read
                      + grid_m * r * out_dim * cb  # B re-fetched per row tile
                      + M * out_dim * ob)        # output write
    ws = _working_set(tm, tn)
    vmem_limit = int(min(max(int(1.5 * ws) + (4 << 20), 32 << 20), limit_cap))

    out2 = pl.pallas_call(
        functools.partial(_lora_kernel, scale=scale),
        out_shape=jax.ShapeDtypeStruct((M, out_dim), out_dtype),
        grid_spec=pltpu.PrefetchScalarGridSpec(
            num_scalar_prefetch=0,
            grid=grid,
            in_specs=[
                pl.BlockSpec((tm, in_dim), lambda i, j: (i, 0)),  # x (j-invariant)
                pl.BlockSpec((in_dim, r), lambda i, j: (0, 0)),   # A (resident)
                pl.BlockSpec((r, tn), lambda i, j: (0, j)),       # B column tile
            ],
            out_specs=pl.BlockSpec((tm, tn), lambda i, j: (i, j)),
            scratch_shapes=[pltpu.VMEM((tm, r), compute_dtype)],  # xa = x @ A
        ),
        compiler_params=pltpu.CompilerParams(
            dimension_semantics=("parallel", "arbitrary"),
            vmem_limit_bytes=vmem_limit,
        ),
        cost_estimate=pl.CostEstimate(
            flops=flops, transcendentals=0, bytes_accessed=bytes_accessed),
    )(x2, Ac, Bc)

    return out2.reshape(*lead, out_dim)


if __name__ == "__main__":
    key = jax.random.PRNGKey(0)
    kx, ka, kb, kx2, ka2, kb2, kx3, ka3, kb3, kx4, ka4, kb4 = jax.random.split(key, 12)

    # --- case 1: small shapes consistent with the module's forward -----------
    batch, seq, in_dim, out_dim, rank, alpha = 2, 8, 32, 32, 4, 8.0
    x = jax.random.normal(kx, (batch, seq, in_dim), dtype=jnp.float32)
    # PyTorch init: A ~ randn(in_dim, rank), B = zeros(rank, out_dim).
    A = jax.random.normal(ka, (in_dim, rank), dtype=jnp.float32)
    # Deterministic nonzero B so the second matmul is actually exercised
    # (the module's literal zeros init would make the output trivially 0).
    B = 0.01 * jax.random.normal(kb, (rank, out_dim), dtype=jnp.float32)

    out = jax.block_until_ready(lora_forward(x, A, B, alpha, rank))
    ref = (alpha / rank) * (x @ A @ B)
    assert out.shape == (batch, seq, out_dim)
    assert jnp.allclose(out, ref, atol=1e-5, rtol=1e-5)

    # --- case 2: ragged rows (M=400) + multiple / ragged column tiles ---------
    b2, s2, i2, o2, r2, a2 = 2, 200, 256, 384, 8, 16.0
    x_b = jax.random.normal(kx2, (b2, s2, i2), dtype=jnp.float32)
    A_b = jax.random.normal(ka2, (i2, r2), dtype=jnp.float32)
    B_b = 0.01 * jax.random.normal(kb2, (r2, o2), dtype=jnp.float32)

    out_b = jax.block_until_ready(lora_forward(x_b, A_b, B_b, a2, r2, tn=128))
    ref_b = (a2 / r2) * (x_b @ A_b @ B_b)
    assert out_b.shape == (b2, s2, o2)
    assert jnp.allclose(out_b, ref_b, atol=1e-4, rtol=1e-4)

    # --- case 3: 2-D input, non-128-multiple out_dim with a clipped col tile --
    m3, i3, o3, r3, a3 = 40, 48, 200, 4, 4.0
    x_c = jax.random.normal(kx3, (m3, i3), dtype=jnp.float32)
    A_c = jax.random.normal(ka3, (i3, r3), dtype=jnp.float32)
    B_c = 0.01 * jax.random.normal(kb3, (r3, o3), dtype=jnp.float32)

    out_c = jax.block_until_ready(lora_forward(x_c, A_c, B_c, a3, r3, tn=128))
    ref_c = (a3 / r3) * (x_c @ A_c @ B_c)
    assert out_c.shape == (m3, o3)
    assert jnp.allclose(out_c, ref_c, atol=1e-4, rtol=1e-4)

    # --- case 4: optional bf16 I/O path (f32 accumulation kept in-kernel) -----
    b4, s4, i4, o4, r4, a4 = 2, 16, 64, 256, 4, 8.0
    x_d = jax.random.normal(kx4, (b4, s4, i4), dtype=jnp.float32)
    A_d = jax.random.normal(ka4, (i4, r4), dtype=jnp.float32)
    B_d = 0.01 * jax.random.normal(kb4, (r4, o4), dtype=jnp.float32)

    out_d = jax.block_until_ready(
        lora_forward(x_d, A_d, B_d, a4, r4, io_dtype=jnp.bfloat16))
    x_dq = x_d.astype(jnp.bfloat16).astype(jnp.float32)
    A_dq = A_d.astype(jnp.bfloat16).astype(jnp.float32)
    B_dq = B_d.astype(jnp.bfloat16).astype(jnp.float32)
    ref_d = (a4 / r4) * (x_dq @ A_dq @ B_dq)
    assert out_d.shape == (b4, s4, o4) and out_d.dtype == jnp.bfloat16
    assert jnp.allclose(out_d.astype(jnp.float32), ref_d, atol=2e-2, rtol=2e-2)

    print("KERNEL_OK")
</pallas_src>

<mosaic_0001>
module attributes {stable_mosaic.version = 11 : i64} {
  func.func @_lora_kernel(%arg0: i32, %arg1: i32, %arg2: memref<16x32xf32, #tpu.memory_space<vmem>>, %arg3: memref<32x4xf32, #tpu.memory_space<vmem>>, %arg4: memref<4x32xf32, #tpu.memory_space<vmem>>, %arg5: memref<16x32xf32, #tpu.memory_space<vmem>>, %arg6: memref<16x4xf32, #tpu.memory_space<vmem>>) attributes {dimension_semantics = [#tpu.dimension_semantics<parallel>, #tpu.dimension_semantics<arbitrary>], iteration_bounds = array<i64: 1, 1>, scalar_prefetch = 0 : i64, scratch_operands = 1 : i64, tpu.core_type = #tpu.core_type<tc>, window_params = [{transform_indices = @transform_0, window_bounds = array<i64: 16, 32>}, {pipeline_mode = #tpu.pipeline_mode<synchronous>, transform_indices = @transform_1, window_bounds = array<i64: 32, 4>}, {transform_indices = @transform_2, window_bounds = array<i64: 4, 32>}, {transform_indices = @transform_3, window_bounds = array<i64: 16, 32>}]} {
    %c0_i32 = arith.constant 0 : i32
    %0 = arith.cmpi eq, %arg1, %c0_i32 : i32
    %1 = arith.extui %0 : i1 to i32
    %c0_i32_0 = arith.constant 0 : i32
    %2 = arith.cmpi ne, %1, %c0_i32_0 : i32
    scf.if %2 {
      %c0_7 = arith.constant 0 : index
      %c0_8 = arith.constant 0 : index
      %9 = vector.load %arg2[%c0_7, %c0_8] : memref<16x32xf32, #tpu.memory_space<vmem>>, vector<16x32xf32>
      %c0_9 = arith.constant 0 : index
      %c0_10 = arith.constant 0 : index
      %10 = vector.load %arg3[%c0_9, %c0_10] : memref<32x4xf32, #tpu.memory_space<vmem>>, vector<32x4xf32>
      %cst_11 = arith.constant dense<0.000000e+00> : vector<16x4xf32>
      %11 = tpu.matmul %9, %10, %cst_11 {dimension_numbers = #tpu.dot_dimension_numbers<[1], [0], [0], [1], [0, 0, 1, 1], [], []>} : vector<16x32xf32>, vector<32x4xf32>, vector<16x4xf32> -> vector<16x4xf32>
      %c0_12 = arith.constant 0 : index
      %c0_13 = arith.constant 0 : index
      %12 = vector.load %arg6[%c0_12, %c0_13] : memref<16x4xf32, #tpu.memory_space<vmem>>, vector<16x4xf32>
      tpu.vector_store %arg6[%c0_12, %c0_13], %11 {strides = array<i32>} : memref<16x4xf32, #tpu.memory_space<vmem>>, vector<16x4xf32>,
    } else {
    }
    %c0 = arith.constant 0 : index
    %c0_1 = arith.constant 0 : index
    %3 = vector.load %arg6[%c0, %c0_1] : memref<16x4xf32, #tpu.memory_space<vmem>>, vector<16x4xf32>
    %c0_2 = arith.constant 0 : index
    %c0_3 = arith.constant 0 : index
    %4 = vector.load %arg4[%c0_2, %c0_3] : memref<4x32xf32, #tpu.memory_space<vmem>>, vector<4x32xf32>
    %cst = arith.constant dense<0.000000e+00> : vector<16x32xf32>
    %5 = tpu.matmul %3, %4, %cst {dimension_numbers = #tpu.dot_dimension_numbers<[1], [0], [0], [1], [0, 0, 1, 1], [], []>} : vector<16x4xf32>, vector<4x32xf32>, vector<16x32xf32> -> vector<16x32xf32>
    %cst_4 = arith.constant 2.000000e+00 : f32
    %6 = vector.broadcast %cst_4 : f32 to vector<16x32xf32>
    %7 = arith.mulf %5, %6 : vector<16x32xf32>
    %c0_5 = arith.constant 0 : index
    %c0_6 = arith.constant 0 : index
    %8 = vector.load %arg5[%c0_5, %c0_6] : memref<16x32xf32, #tpu.memory_space<vmem>>, vector<16x32xf32>
    tpu.vector_store %arg5[%c0_5, %c0_6], %7 {strides = array<i32>} : memref<16x32xf32, #tpu.memory_space<vmem>>, vector<16x32xf32>,
    return
  }
  func.func @transform_0(%arg0: i32, %arg1: i32) -> (i32, i32) {
    %c0_i32 = arith.constant 0 : i32
    %c0_i32_0 = arith.constant 0 : i32
    return %arg0, %c0_i32 : i32, i32
  }
  func.func @transform_1(%arg0: i32, %arg1: i32) -> (i32, i32) {
    %c0_i32 = arith.constant 0 : i32
    %c0_i32_0 = arith.constant 0 : i32
    %c0_i32_1 = arith.constant 0 : i32
    return %c0_i32, %c0_i32_0 : i32, i32
  }
  func.func @transform_2(%arg0: i32, %arg1: i32) -> (i32, i32) {
    %c0_i32 = arith.constant 0 : i32
    %c0_i32_0 = arith.constant 0 : i32
    return %c0_i32, %arg1 : i32, i32
  }
  func.func @transform_3(%arg0: i32, %arg1: i32) -> (i32, i32) {
    %c0_i32 = arith.constant 0 : i32
    return %arg0, %arg1 : i32, i32
  }
}

</mosaic_0001>

<llo_original>
// kernel: tpu_custom_call.1
$region0: #{tpu_custom_call.1}
  #allocation0 [shape = 'u32[]', space=smem, size = 0x4, offset = 0x4, fixed_abs, tag = 'smem constant byte address 0x4 - core index']
  #allocation1 [shape = 'u32[144,128]{1,0:T(1,128)}', space=vmem, size = 0x12000, scoped, tag = 'internal scratch']
  #allocation2 [shape = 'f32[16,4]{1,0:T(8,128)}', space=vmem, size = 0x2000, scoped, tag = 'scratch operand']
  %s0 = inlined_call_operand.vmem [shape: f32[16,32], index: 0, kind: input, shape index: {}]
  %s1 = inlined_call_operand.vmem [shape: f32[32,4], index: 1, kind: input, shape index: {}]
  %s2 = inlined_call_operand.vmem [shape: f32[4,32], index: 2, kind: input, shape index: {}]
  %s3 = inlined_call_operand.hbm [shape: f32[16,32], index: 3, kind: output, shape index: {}]
  %s4 = sld [smem:[#allocation0]]
  $region26: #{tpu_custom_call.1} parent=0
    _
  %s6 = ssub.s32 1, %s4
  %s7 = scalar_select 0, %s6, %s4
  $region1: #{tpu_custom_call.1} parent=0
    #allocation3 [shape = 'u8[8192]{0}', space=vmem, size = 0x2000, scoped, tag = 'output window, operand 0, single buffered']
    #allocation4 [shape = 's32[1]{0}', space=sflag, size = 0x4, scoped, tag = 'scoped memory for tpu_custom_call.1']
    %8 = vsyncpa [#allocation4], 0
    // Predicated region
    $region2: #{tpu_custom_call.1} parent=1 // pred_check
      _
    $region3: #{tpu_custom_call.1} parent=1 // pred_check_branch
      %10 = sbr.rel (0) target = $region5
    $region4: #{tpu_custom_call.1} parent=1 // pred_region
      _
    $region5: #{tpu_custom_call.1} parent=1 // pred_fallthru
      _
    // Predicated region
    $region6: #{tpu_custom_call.1} parent=1 // pred_check
      _
    $region7: #{tpu_custom_call.1} parent=1 // pred_check_branch
      %12 = sbr.rel (0) target = $region9
    $region8: #{tpu_custom_call.1} parent=1 // pred_region
      _
    $region9: #{tpu_custom_call.1} parent=1 // pred_fallthru
      _
    // Predicated region
    $region10: #{tpu_custom_call.1} parent=1 // pred_check
      _
    $region11: #{tpu_custom_call.1} parent=1 // pred_check_branch
      %14 = sbr.rel (0) target = $region13
    $region12: #{tpu_custom_call.1} parent=1 // pred_region
      _
    $region13: #{tpu_custom_call.1} parent=1 // pred_fallthru
      _
    %p15 = scmp.eq.s32.totalorder 0, 0
    // Predicated region
    $region14: #{tpu_custom_call.1} parent=1 // pred_check
      %p16 = pneg %p15
    $region15: #{tpu_custom_call.1} parent=1 // pred_check_branch
      %18 = sbr.rel (%p16) target = $region17
    $region16: #{tpu_custom_call.1} parent=1 // pred_region
      %v19 = vld [vmem:[%s0] sm:$0xff]
      %v20 = vld [vmem:[%s0 + $0x8] sm:$0xff]
      %v21 = vld [vmem:[%s1] sm:$0xff]
      %v22 = vld [vmem:[%s1 + $0x8] sm:$0xff]
      %v23 = vld [vmem:[%s1 + $0x10] sm:$0xff]
      %v24 = vld [vmem:[%s1 + $0x18] sm:$0xff]
      %vm25 = vcmask 261120
      %v27 = vsel %vm25, %v19, 0
      %v30 = vsel %vm25, %v20, 0
      %32 = vmatprep.subr.mxu0 0.0
      %33 = vmatpush1.msra.mxu0 %v21
      %34 = vmatprep.subr.mxu0 0.0
      %35 = vmatpush1.msra.mxu0 %v22
      %36 = vmatprep.subr.mxu0 0.0
      %37 = vmatpush1.msra.mxu0 %v23
      %38 = vmatprep.subr.mxu0 0.0
      %39 = vmatpush1.msra.mxu0 %v24
      %40 = vmatprep.subr.mxu0 0.0
      %41 = vmatpush1.msra.mxu0 0.0
      %42 = vmatprep.subr.mxu0 0.0
      %43 = vmatpush1.msra.mxu0 0.0
      %44 = vmatprep.subr.mxu0 0.0
      %45 = vmatpush1.msra.mxu0 0.0
      %46 = vmatprep.subr.mxu0 0.0
      %47 = vmatpush1.msra.mxu0 0.0
      %48 = vmatprep.subr.mxu0 0.0
      %49 = vmatpush1.msra.mxu0 0.0
      %50 = vmatprep.subr.mxu0 0.0
      %51 = vmatpush1.msra.mxu0 0.0
      %52 = vmatprep.subr.mxu0 0.0
      %53 = vmatpush1.msra.mxu0 0.0
      %54 = vmatprep.subr.mxu0 0.0
      %55 = vmatpush1.msra.mxu0 0.0
      %56 = vmatprep.subr.mxu0 0.0
      %57 = vmatpush1.msra.mxu0 0.0
      %58 = vmatprep.subr.mxu0 0.0
      %59 = vmatpush1.msra.mxu0 0.0
      %60 = vmatprep.subr.mxu0 0.0
      %61 = vmatpush1.msra.mxu0 0.0
      %62 = vmatprep.subr.mxu0 0.0
      %63 = vmatpush1.msra.mxu0 0.0
      %64 = vmatprep.subr.mxu0 0.0
      %65 = vmatpush1.msra.mxu0 0.0
      %66 = vmatprep.subr.mxu0 0.0
      %67 = vmatpush1.msra.mxu0 0.0
      %68 = vmatprep.subr.mxu0 0.0
      %69 = vmatpush1.msra.mxu0 0.0
      %70 = vmatprep.subr.mxu0 0.0
      %71 = vmatpush1.msra.mxu0 0.0
      %72 = vmatprep.subr.mxu0 0.0
      %73 = vmatpush1.msra.mxu0 0.0
      %74 = vmatprep.subr.mxu0 0.0
      %75 = vmatpush1.msra.mxu0 0.0
      %76 = vmatprep.subr.mxu0 0.0
      %77 = vmatpush1.msra.mxu0 0.0
      %78 = vmatprep.subr.mxu0 0.0
      %79 = vmatpush1.msra.mxu0 0.0
      %80 = vmatprep.subr.mxu0 0.0
      %81 = vmatpush1.msra.mxu0 0.0
      %82 = vmatprep.subr.mxu0 0.0
      %83 = vmatpush1.msra.mxu0 0.0
      %84 = vmatprep.subr.mxu0 0.0
      %85 = vmatpush1.msra.mxu0 0.0
      %86 = vmatprep.subr.mxu0 0.0
      %87 = vmatpush1.msra.mxu0 0.0
      %88 = vmatprep.subr.mxu0 0.0
      %89 = vmatpush1.msra.mxu0 0.0
      %90 = vmatprep.subr.mxu0 0.0
      %91 = vmatpush1.msra.mxu0 0.0
      %92 = vmatprep.subr.mxu0 0.0
      %93 = vmatpush1.msra.mxu0 0.0
      %94 = vmatprep.subr.mxu0 0.0
      %95 = vmatpush1.msra.mxu0 0.0
      %96 = vmatprep.mubr.f32.mxu0 0.0
      %97 = vmatmul.mubr.f32.gmra.mrb[0].mxu0 %v27
      %v98 = vpop.f32.mrb[0].mxu0
      %v99 = vadd.f32 0.0, %v98
      %v100 = vpop.f32.mrb[0].mxu0
      %101 = vmatprep.mubr.f32.mxu0 0.0
      %102 = vmatmul.mubr.f32.gmra.mrb[0].mxu0 %v30
      %v103 = vpop.f32.mrb[0].mxu0
      %v104 = vadd.f32 0.0, %v103
      %v105 = vpop.f32.mrb[0].mxu0
      %106 = vdwg.mxu0
      %vm107 = vcmask 31744
      %108 = vst.msk [vmem:[#allocation2] sm:$0xff] %vm107, %v99
      %109 = vst.msk [vmem:[#allocation2 + $0x8] sm:$0xff] %vm107, %v104
    $region17: #{tpu_custom_call.1} parent=1 // pred_fallthru
      _
    %v110 = vld [vmem:[#allocation2] sm:$0xff]
    %v111 = vld [vmem:[#allocation2 + $0x8] sm:$0xff]
    %v112 = vld [vmem:[%s2] sm:$0xf]
    %vm113 = vcmask 31744
    %v115 = vsel %vm113, %v110, 0
    %v118 = vsel %vm113, %v111, 0
    %vm120 = vcmask 1043456
    %v122 = vsel %vm120, %v112, 0
    %124 = vmatprep.subr.mxu0 0.0
    %125 = vmatpush1.msra.mxu0 %v122
    %126 = vmatprep.subr.mxu0 0.0
    %127 = vmatpush1.msra.mxu0 0.0
    %128 = vmatprep.subr.mxu0 0.0
    %129 = vmatpush1.msra.mxu0 0.0
    %130 = vmatprep.subr.mxu0 0.0
    %131 = vmatpush1.msra.mxu0 0.0
    %132 = vmatprep.subr.mxu0 0.0
    %133 = vmatpush1.msra.mxu0 0.0
    %134 = vmatprep.subr.mxu0 0.0
    %135 = vmatpush1.msra.mxu0 0.0
    %136 = vmatprep.subr.mxu0 0.0
    %137 = vmatpush1.msra.mxu0 0.0
    %138 = vmatprep.subr.mxu0 0.0
    %139 = vmatpush1.msra.mxu0 0.0
    %140 = vmatprep.subr.mxu0 0.0
    %141 = vmatpush1.msra.mxu0 0.0
    %142 = vmatprep.subr.mxu0 0.0
    %143 = vmatpush1.msra.mxu0 0.0
    %144 = vmatprep.subr.mxu0 0.0
    %145 = vmatpush1.msra.mxu0 0.0
    %146 = vmatprep.subr.mxu0 0.0
    %147 = vmatpush1.msra.mxu0 0.0
    %148 = vmatprep.subr.mxu0 0.0
    %149 = vmatpush1.msra.mxu0 0.0
    %150 = vmatprep.subr.mxu0 0.0
    %151 = vmatpush1.msra.mxu0 0.0
    %152 = vmatprep.subr.mxu0 0.0
    %153 = vmatpush1.msra.mxu0 0.0
    %154 = vmatprep.subr.mxu0 0.0
    %155 = vmatpush1.msra.mxu0 0.0
    %156 = vmatprep.subr.mxu0 0.0
    %157 = vmatpush1.msra.mxu0 0.0
    %158 = vmatprep.subr.mxu0 0.0
    %159 = vmatpush1.msra.mxu0 0.0
    %160 = vmatprep.subr.mxu0 0.0
    %161 = vmatpush1.msra.mxu0 0.0
    %162 = vmatprep.subr.mxu0 0.0
    %163 = vmatpush1.msra.mxu0 0.0
    %164 = vmatprep.subr.mxu0 0.0
    %165 = vmatpush1.msra.mxu0 0.0
    %166 = vmatprep.subr.mxu0 0.0
    %167 = vmatpush1.msra.mxu0 0.0
    %168 = vmatprep.subr.mxu0 0.0
    %169 = vmatpush1.msra.mxu0 0.0
    %170 = vmatprep.subr.mxu0 0.0
    %171 = vmatpush1.msra.mxu0 0.0
    %172 = vmatprep.subr.mxu0 0.0
    %173 = vmatpush1.msra.mxu0 0.0
    %174 = vmatprep.subr.mxu0 0.0
    %175 = vmatpush1.msra.mxu0 0.0
    %176 = vmatprep.subr.mxu0 0.0
    %177 = vmatpush1.msra.mxu0 0.0
    %178 = vmatprep.subr.mxu0 0.0
    %179 = vmatpush1.msra.mxu0 0.0
    %180 = vmatprep.subr.mxu0 0.0
    %181 = vmatpush1.msra.mxu0 0.0
    %182 = vmatprep.subr.mxu0 0.0
    %183 = vmatpush1.msra.mxu0 0.0
    %184 = vmatprep.subr.mxu0 0.0
    %185 = vmatpush1.msra.mxu0 0.0
    %186 = vmatprep.subr.mxu0 0.0
    %187 = vmatpush1.msra.mxu0 0.0
    %188 = vmatprep.mubr.f32.mxu0 0.0
    %189 = vmatmul.mubr.f32.gmra.mrb[0].mxu0 %v115
    %v190 = vpop.f32.mrb[0].mxu0
    %v191 = vadd.f32 0.0, %v190
    %v192 = vpop.f32.mrb[0].mxu0
    %193 = vmatprep.mubr.f32.mxu0 0.0
    %194 = vmatmul.mubr.f32.gmra.mrb[0].mxu0 %v118
    %v195 = vpop.f32.mrb[0].mxu0
    %v196 = vadd.f32 0.0, %v195
    %v197 = vpop.f32.mrb[0].mxu0
    %198 = vdwg.mxu0
    %v199 = vmul.f32 %v191, 2.0
    %v200 = vmul.f32 %v196, 2.0
    %vm201 = vcmask 261120
    %202 = vst.msk [vmem:[#allocation3] sm:$0xff] %vm201, %v199
    %203 = vst.msk [vmem:[#allocation3 + $0x8] sm:$0xff] %vm201, %v200
    // Predicated region
    $region18: #{tpu_custom_call.1} parent=1 // pred_check
      _
    $region19: #{tpu_custom_call.1} parent=1 // pred_check_branch
      %205 = sbr.rel (0) target = $region21
    $region20: #{tpu_custom_call.1} parent=1 // pred_region
      %s207 = ssub.s32 256, 256
      %208 = vsyncadd [#allocation4], %s207
      %s209 = sshll.u32 [#allocation3], 4
      %s210 = int_to_ptr.vmem [resolvable:$true] %s209
      %215 = dma.vmem_to_hbm [thread:$0]  %s210, 256, %s3, [#allocation4], 128, 128, 8
    $region21: #{tpu_custom_call.1} parent=1 // pred_fallthru
      _
    // Predicated region
    $region22: #{tpu_custom_call.1} parent=1 // pred_check
      _
    $region23: #{tpu_custom_call.1} parent=1 // pred_check_branch
      %217 = sbr.rel (0) target = $region25
    $region24: #{tpu_custom_call.1} parent=1 // pred_region
      %218 = dma.done [#allocation4], 256
    $region25: #{tpu_custom_call.1} parent=1 // pred_fallthru
      _
    %219 = vsyncpa [#allocation4], 1

</llo_original>
